<compile_context>
chip_gen: v7x
topology: tpu7x:2x2x1
jax: 0.10.0
libtpu: 0.0.40
codegen_flags: <defaults>
</compile_context>

<pallas_src>
import functools

import jax
import jax.numpy as jnp
from jax.experimental import pallas as pl
from jax.experimental.pallas import tpu as pltpu


def _logit_margin_loss_kernel(logits_ref, label_ref, out_ref, acc_ref, *,
                              batch, tb, steps, blocks_total):
    c = pl.program_id(0)          # TensorCore / partial-sum index ("parallel")
    s = pl.program_id(1)          # batch-block step within this core ("arbitrary")

    @pl.when(s == 0)
    def _():
        acc_ref[...] = jnp.zeros_like(acc_ref)

    x = logits_ref[...]                                        # (tb, C), input dtype
    cdim = x.shape[1]
    col = jax.lax.broadcasted_iota(jnp.int32, (tb, cdim), 1)

    # ---- top-2 per row with torch.sort duplicate semantics: remove exactly
    # ONE occurrence of the max (the first), then take the max again.
    # Kept in the input dtype so bf16 inputs use the 2x-wide bf16 VALU path.
    m1 = jnp.max(x, axis=1, keepdims=True)                     # (tb, 1)
    first_max_idx = jnp.min(jnp.where(x == m1, col, cdim), axis=1, keepdims=True)
    m2 = jnp.max(jnp.where(col == first_max_idx, -jnp.inf, x), axis=1, keepdims=True)

    m1f = m1.astype(jnp.float32)
    margin = m1f - m2.astype(jnp.float32)                      # (tb, 1), > 0 unless ties
    inv_margin = pl.reciprocal(margin)                         # exact, per-row only

    # z = scaled - max(scaled); since margin > 0, max(scaled) == m1*inv_margin,
    # so z = (x - m1) * inv_margin.  Only ONE live (tb, C) f32 temporary.
    z = (x.astype(jnp.float32) - m1f) * inv_margin             # (tb, C)
    lse = jnp.log(jnp.sum(jnp.exp(z), axis=1, keepdims=True))  # (tb, 1)

    # ---- pick the label term straight from z with a masked lane-sum
    # (no (tb, C) logprob temporary).  Labels live resident in VMEM; slice the
    # rows of this tile dynamically (block index clamped so the slice is
    # always in bounds, nominal row index used for masking).
    nominal_block = c * steps + s
    clamped_block = jnp.minimum(nominal_block, blocks_total - 1)
    lab_start = pl.multiple_of(clamped_block * tb, 8)
    lab = label_ref[pl.ds(lab_start, tb), :]                   # (tb, 1) int32
    picked = jnp.sum(jnp.where(col == lab, z, 0.0), axis=1, keepdims=True)

    # mask rows past the real batch (partial / duplicated trailing tile); a
    # select (not a multiply) so NaN/inf garbage never reaches the accumulator.
    row = jax.lax.broadcasted_iota(jnp.int32, (tb, 1), 0) + nominal_block * tb
    acc_ref[...] += jnp.where(row < batch, picked - lse, 0.0)  # (tb, 1)

    @pl.when(s == steps - 1)
    def _():
        # -CE_sum == sum_b logprob[b, label[b]]; one partial sum per core,
        # replicated over a lane-dense (8,128) block (single unmasked store).
        partial = jnp.sum(acc_ref[...])
        out_ref[...] = jnp.broadcast_to(partial, out_ref.shape).astype(out_ref.dtype)


def _round_up(x, m):
    return ((x + m - 1) // m) * m


def _cdiv(a, b):
    return -(-a // b)


def _device_kind() -> str:
    try:
        return jax.devices()[0].device_kind.lower()
    except Exception:
        return ""


def logit_margin_loss(logits: jax.Array, label: jax.Array,
                      tb: int | None = None,
                      num_cores: int | None = None,
                      vmem_limit_bytes: int | None = None) -> jax.Array:
    """logits: [B, C] float (f32 or bf16), label: [B] int -> scalar f32."""
    B, C = logits.shape
    kind = _device_kind()
    is_v7 = "v7" in kind

    # --- batch tile: the kernel streams B*C once from HBM, so take the biggest
    # tile that leaves VMEM headroom.  ~2M elements (~8 MiB f32/buffer) on
    # v5e/v6e (128 MiB VMEM), ~1M on v7x (64 MiB).
    if tb is None:
        cap_elems = (1 if is_v7 else 2) * 1024 * 1024
        tb = max(8, ((cap_elems // max(C, 1)) // 8) * 8)
    tb = max(8, min(_round_up(tb, 8), _round_up(B, 8)))
    blocks_total = _cdiv(B, tb)

    # --- TensorCore split (v7x has 2 TCs, each with its own HBM BW + VPU).
    # Harmless (just a longer sequential grid) if the chip only has one TC.
    if num_cores is None:
        num_cores = 2 if is_v7 else 1
    num_cores = max(1, min(int(num_cores), blocks_total))
    steps = _cdiv(blocks_total, num_cores)

    # --- VMEM budget: 64 MiB physical on v7x vs 128 MiB on v5e/v6e.
    if vmem_limit_bytes is None:
        vmem_limit_bytes = (48 if is_v7 else 96) * 1024 * 1024

    # labels resident in VMEM for the whole kernel: ONE DMA instead of a tiny
    # (tb,1) copy per grid step; padded so the dynamic slice never goes OOB.
    b_pad = blocks_total * tb
    label2d = jnp.pad(label.astype(jnp.int32).reshape(B, 1), ((0, b_pad - B), (0, 0)))

    def logits_index(c, s):
        return (jnp.minimum(c * steps + s, blocks_total - 1), 0)

    cost = pl.CostEstimate(
        flops=int(8 * B * C),
        transcendentals=int(B * C + 3 * B),
        bytes_accessed=int(B * C * logits.dtype.itemsize + B * 4
                           + num_cores * 8 * 128 * 4),
    )

    kernel = functools.partial(_logit_margin_loss_kernel, batch=B, tb=tb,
                               steps=steps, blocks_total=blocks_total)
    out = pl.pallas_call(
        kernel,
        out_shape=jax.ShapeDtypeStruct((num_cores, 8, 128), jnp.float32),
        grid_spec=pltpu.PrefetchScalarGridSpec(
            num_scalar_prefetch=0,
            grid=(num_cores, steps),
            in_specs=[
                pl.BlockSpec((tb, C), logits_index),
                pl.BlockSpec((b_pad, 1), lambda c, s: (0, 0)),   # one resident copy
            ],
            out_specs=pl.BlockSpec((1, 8, 128), lambda c, s: (c, 0, 0)),
            scratch_shapes=[pltpu.VMEM((tb, 1), jnp.float32)],
        ),
        compiler_params=pltpu.CompilerParams(
            dimension_semantics=("parallel", "arbitrary"),
            vmem_limit_bytes=int(vmem_limit_bytes),
        ),
        cost_estimate=cost,
    )(logits, label2d)

    # one partial sum per TensorCore (replicated across its (8,128) block)
    return jnp.sum(out[:, 0, 0])

    # TODO(synk): for vocab-scale C (tile > VMEM even at tb=8), also tile the
    # class axis with an online top-2 + online-softmax accumulation.


def _reference(logits, label):
    # plain-JAX reference for sanity
    srt = jnp.sort(logits, axis=1)[:, ::-1]
    margin = (srt[:, 0] - srt[:, 1])[:, None]
    scaled = logits / margin
    logprob = jax.nn.log_softmax(scaled, axis=1)
    ce = -jnp.sum(logprob[jnp.arange(logits.shape[0]), label])
    return -ce


if __name__ == "__main__":
    key = jax.random.PRNGKey(0)
    kx, kl = jax.random.split(key)
    B, C = 24, 128                      # small synthetic shapes: batch=24, classes=128
    logits = jax.random.normal(kx, (B, C), dtype=jnp.float32) * 3.0
    label = jax.random.randint(kl, (B,), 0, C, dtype=jnp.int32)

    ref = _reference(logits, label)

    # auto-tuned path (tile size / core count picked from the device kind)
    out = logit_margin_loss(logits, label)
    jax.block_until_ready(out)
    assert jnp.allclose(out, ref, atol=1e-4, rtol=1e-4), (out, ref)

    # forced multi-tile, two-partial-sum path: exercises the accumulator
    # init/finalize, the clamped trailing block and the per-core outputs.
    out2 = logit_margin_loss(logits, label, tb=8, num_cores=2)
    jax.block_until_ready(out2)
    assert jnp.allclose(out2, ref, atol=1e-4, rtol=1e-4), (out2, ref)

    print("KERNEL_OK")
</pallas_src>

<mosaic_0001>
module attributes {stable_mosaic.version = 11 : i64} {
  func.func @_logit_margin_loss_kernel(%arg0: i32, %arg1: i32, %arg2: memref<24x128xf32, #tpu.memory_space<vmem>>, %arg3: memref<24x1xi32, #tpu.memory_space<vmem>>, %arg4: memref<1x8x128xf32, #tpu.memory_space<vmem>>, %arg5: memref<24x1xf32, #tpu.memory_space<vmem>>) attributes {dimension_semantics = [#tpu.dimension_semantics<parallel>, #tpu.dimension_semantics<arbitrary>], iteration_bounds = array<i64: 1, 1>, scalar_prefetch = 0 : i64, scratch_operands = 1 : i64, tpu.core_type = #tpu.core_type<tc>, window_params = [{transform_indices = @transform_0, window_bounds = array<i64: 24, 128>}, {pipeline_mode = #tpu.pipeline_mode<synchronous>, transform_indices = @transform_1, window_bounds = array<i64: 24, 1>}, {transform_indices = @transform_2, window_bounds = array<i64: 1, 8, 128>}]} {
    %c0_i32 = arith.constant 0 : i32
    %0 = arith.cmpi eq, %arg1, %c0_i32 : i32
    %1 = arith.extui %0 : i1 to i32
    %c0_i32_0 = arith.constant 0 : i32
    %2 = arith.cmpi ne, %1, %c0_i32_0 : i32
    scf.if %2 {
      %cst_19 = arith.constant 0.000000e+00 : f32
      %57 = vector.broadcast %cst_19 : f32 to vector<24x1xf32>
      %c0_20 = arith.constant 0 : index
      %c0_21 = arith.constant 0 : index
      %58 = vector.load %arg5[%c0_20, %c0_21] : memref<24x1xf32, #tpu.memory_space<vmem>>, vector<24x1xf32>
      tpu.vector_store %arg5[%c0_20, %c0_21], %57 {strides = array<i32>} : memref<24x1xf32, #tpu.memory_space<vmem>>, vector<24x1xf32>,
    } else {
    }
    %c0 = arith.constant 0 : index
    %c0_1 = arith.constant 0 : index
    %3 = vector.load %arg2[%c0, %c0_1] : memref<24x128xf32, #tpu.memory_space<vmem>>, vector<24x128xf32>
    %4 = tpu.iota {dimensions = array<i32: 1>} : vector<24x128xi32>
    %cst = arith.constant dense<0xFF800000> : vector<24xf32>
    %5 = vector.multi_reduction <maximumf>, %3, %cst [1] : vector<24x128xf32> to vector<24xf32>
    %6 = vector.shape_cast %5 : vector<24xf32> to vector<24x1xf32>
    %7 = vector.broadcast %6 : vector<24x1xf32> to vector<24x128xf32>
    %8 = arith.cmpf oeq, %3, %7 : vector<24x128xf32>
    %c128_i32 = arith.constant 128 : i32
    %9 = vector.broadcast %c128_i32 : i32 to vector<24x128xi32>
    %10 = arith.select %8, %4, %9 : vector<24x128xi1>, vector<24x128xi32>
    %cst_2 = arith.constant dense<2147483647> : vector<24xi32>
    %11 = vector.multi_reduction <minsi>, %10, %cst_2 [1] : vector<24x128xi32> to vector<24xi32>
    %12 = vector.shape_cast %11 : vector<24xi32> to vector<24x1xi32>
    %13 = vector.broadcast %12 : vector<24x1xi32> to vector<24x128xi32>
    %14 = arith.cmpi eq, %4, %13 : vector<24x128xi32>
    %cst_3 = arith.constant 0xFF800000 : f32
    %15 = vector.broadcast %cst_3 : f32 to vector<24x128xf32>
    %16 = arith.select %14, %15, %3 : vector<24x128xi1>, vector<24x128xf32>
    %cst_4 = arith.constant dense<0xFF800000> : vector<24xf32>
    %17 = vector.multi_reduction <maximumf>, %16, %cst_4 [1] : vector<24x128xf32> to vector<24xf32>
    %18 = vector.shape_cast %17 : vector<24xf32> to vector<24x1xf32>
    %19 = arith.subf %6, %18 : vector<24x1xf32>
    %20 = tpu.reciprocal %19 : vector<24x1xf32> -> vector<24x1xf32>
    %21 = vector.broadcast %6 : vector<24x1xf32> to vector<24x128xf32>
    %22 = arith.subf %3, %21 : vector<24x128xf32>
    %23 = vector.broadcast %20 : vector<24x1xf32> to vector<24x128xf32>
    %24 = arith.mulf %22, %23 : vector<24x128xf32>
    %25 = math.exp %24 : vector<24x128xf32>
    %cst_5 = arith.constant dense<0.000000e+00> : vector<24xf32>
    %26 = vector.multi_reduction <add>, %25, %cst_5 [1] : vector<24x128xf32> to vector<24xf32>
    %27 = vector.shape_cast %26 : vector<24xf32> to vector<24x1xf32>
    %28 = math.log %27 : vector<24x1xf32>
    %c1_i32 = arith.constant 1 : i32
    %29 = arith.muli %arg0, %c1_i32 : i32
    %30 = arith.addi %29, %arg1 : i32
    %c0_i32_6 = arith.constant 0 : i32
    %31 = arith.minsi %30, %c0_i32_6 : i32
    %c24_i32 = arith.constant 24 : i32
    %32 = arith.muli %31, %c24_i32 : i32
    %33 = tpu.assume_multiple %32, 8 : i32
    %34 = arith.index_cast %33 : i32 to index
    %c0_7 = arith.constant 0 : index
    %35 = vector.load %arg3[%34, %c0_7] : memref<24x1xi32, #tpu.memory_space<vmem>>, vector<24x1xi32>
    %36 = vector.broadcast %35 : vector<24x1xi32> to vector<24x128xi32>
    %37 = arith.cmpi eq, %4, %36 : vector<24x128xi32>
    %cst_8 = arith.constant 0.000000e+00 : f32
    %38 = vector.broadcast %cst_8 : f32 to vector<24x128xf32>
    %39 = arith.select %37, %24, %38 : vector<24x128xi1>, vector<24x128xf32>
    %cst_9 = arith.constant dense<0.000000e+00> : vector<24xf32>
    %40 = vector.multi_reduction <add>, %39, %cst_9 [1] : vector<24x128xf32> to vector<24xf32>
    %41 = vector.shape_cast %40 : vector<24xf32> to vector<24x1xf32>
    %42 = tpu.iota {dimensions = array<i32: 0>} : vector<24x1xi32>
    %c24_i32_10 = arith.constant 24 : i32
    %43 = arith.muli %30, %c24_i32_10 : i32
    %44 = vector.broadcast %43 : i32 to vector<24x1xi32>
    %45 = arith.addi %42, %44 : vector<24x1xi32>
    %c0_11 = arith.constant 0 : index
    %c0_12 = arith.constant 0 : index
    %46 = vector.load %arg5[%c0_11, %c0_12] : memref<24x1xf32, #tpu.memory_space<vmem>>, vector<24x1xf32>
    %c24_i32_13 = arith.constant 24 : i32
    %47 = vector.broadcast %c24_i32_13 : i32 to vector<24x1xi32>
    %48 = arith.cmpi slt, %45, %47 : vector<24x1xi32>
    %49 = arith.subf %41, %28 : vector<24x1xf32>
    %cst_14 = arith.constant 0.000000e+00 : f32
    %50 = vector.broadcast %cst_14 : f32 to vector<24x1xf32>
    %51 = arith.select %48, %49, %50 : vector<24x1xi1>, vector<24x1xf32>
    %52 = arith.addf %46, %51 : vector<24x1xf32>
    %c0_15 = arith.constant 0 : index
    %c0_16 = arith.constant 0 : index
    %53 = vector.load %arg5[%c0_15, %c0_16] : memref<24x1xf32, #tpu.memory_space<vmem>>, vector<24x1xf32>
    tpu.vector_store %arg5[%c0_15, %c0_16], %52 {strides = array<i32>} : memref<24x1xf32, #tpu.memory_space<vmem>>, vector<24x1xf32>,
    %c0_i32_17 = arith.constant 0 : i32
    %54 = arith.cmpi eq, %arg1, %c0_i32_17 : i32
    %55 = arith.extui %54 : i1 to i32
    %c0_i32_18 = arith.constant 0 : i32
    %56 = arith.cmpi ne, %55, %c0_i32_18 : i32
    scf.if %56 {
      %c0_19 = arith.constant 0 : index
      %c0_20 = arith.constant 0 : index
      %57 = vector.load %arg5[%c0_19, %c0_20] : memref<24x1xf32, #tpu.memory_space<vmem>>, vector<24x1xf32>
      %58 = vector.shape_cast %57 : vector<24x1xf32> to vector<1x24x1xf32>
      %cst_21 = arith.constant dense<0.000000e+00> : vector<1xf32>
      %59 = vector.multi_reduction <add>, %58, %cst_21 [1, 2] : vector<1x24x1xf32> to vector<1xf32>
      %60 = vector.shape_cast %59 : vector<1xf32> to vector<1x1x1xf32>
      %61 = vector.extract %60[0, 0, 0] : f32 from vector<1x1x1xf32>
      %62 = vector.broadcast %61 : f32 to vector<1x8x128xf32>
      %c0_22 = arith.constant 0 : index
      %c0_23 = arith.constant 0 : index
      %c0_24 = arith.constant 0 : index
      %63 = vector.load %arg4[%c0_22, %c0_23, %c0_24] : memref<1x8x128xf32, #tpu.memory_space<vmem>>, vector<1x8x128xf32>
      tpu.vector_store %arg4[%c0_22, %c0_23, %c0_24], %62 {strides = array<i32>} : memref<1x8x128xf32, #tpu.memory_space<vmem>>, vector<1x8x128xf32>,
    } else {
    }
    return
  }
  func.func @transform_0(%arg0: i32, %arg1: i32) -> (i32, i32) {
    %c1_i32 = arith.constant 1 : i32
    %0 = arith.muli %arg0, %c1_i32 : i32
    %1 = arith.addi %0, %arg1 : i32
    %c0_i32 = arith.constant 0 : i32
    %2 = arith.minsi %1, %c0_i32 : i32
    %c0_i32_0 = arith.constant 0 : i32
    %c0_i32_1 = arith.constant 0 : i32
    return %2, %c0_i32_0 : i32, i32
  }
  func.func @transform_1(%arg0: i32, %arg1: i32) -> (i32, i32) {
    %c0_i32 = arith.constant 0 : i32
    %c0_i32_0 = arith.constant 0 : i32
    %c0_i32_1 = arith.constant 0 : i32
    return %c0_i32, %c0_i32_0 : i32, i32
  }
  func.func @transform_2(%arg0: i32, %arg1: i32) -> (i32, i32, i32) {
    %c0_i32 = arith.constant 0 : i32
    %c0_i32_0 = arith.constant 0 : i32
    %c0_i32_1 = arith.constant 0 : i32
    return %arg0, %c0_i32, %c0_i32_0 : i32, i32, i32
  }
}

</mosaic_0001>

<llo_original>
// kernel: tpu_custom_call.1
$region0: #{tpu_custom_call.1}
  #allocation0 [shape = 'u32[]', space=smem, size = 0x4, offset = 0x4, fixed_abs, tag = 'smem constant byte address 0x4 - core index']
  #allocation1 [shape = 'u32[144,128]{1,0:T(1,128)}', space=vmem, size = 0x12000, scoped, tag = 'internal scratch']
  #allocation2 [shape = 'f32[24,1]{1,0:T(8,128)}', space=vmem, size = 0x3000, scoped, tag = 'scratch operand']
  %s0 = inlined_call_operand.hbm [shape: f32[24,128], index: 0, kind: input, shape index: {}]
  %s1 = inlined_call_operand.hbm [shape: s32[24,1], index: 1, kind: input, shape index: {}]
  %s2 = inlined_call_operand.hbm [shape: f32[1,8,128], index: 2, kind: output, shape index: {}]
  %s3 = sld [smem:[#allocation0]]
  $region34: #{tpu_custom_call.1} parent=0
    _
  %s5 = ssub.s32 1, %s3
  %s6 = scalar_select 0, %s5, %s3
  $region1: #{tpu_custom_call.1} parent=0
    #allocation3 [shape = 'u8[12288]{0}', space=vmem, size = 0x3000, scoped, tag = 'input window, operand 0, single buffered']
    #allocation4 [shape = 's32[1]{0}', space=sflag, size = 0x4, scoped, tag = 'scoped memory for tpu_custom_call.1']
    #allocation5 [shape = 's32[1]{0}', space=sflag, size = 0x4, scoped, tag = 'scoped memory for tpu_custom_call.1']
    #allocation6 [shape = 'u8[12288]{0}', space=vmem, size = 0x3000, scoped, tag = 'input window, operand 1, single buffered']
    #allocation7 [shape = 's32[1]{0}', space=sflag, size = 0x4, scoped, tag = 'scoped memory for tpu_custom_call.1']
    #allocation8 [shape = 'u8[4096]{0}', space=vmem, size = 0x1000, scoped, tag = 'output window, operand 0, single buffered']
    %7 = vsyncpa [#allocation4], 0
    %8 = vsyncpa [#allocation7], 0
    %9 = vsyncpa [#allocation5], 0
    // Predicated region
    $region2: #{tpu_custom_call.1} parent=1 // pred_check
      _
    $region3: #{tpu_custom_call.1} parent=1 // pred_check_branch
      %11 = sbr.rel (0) target = $region5
    $region4: #{tpu_custom_call.1} parent=1 // pred_region
      %s12 = sadd.s32 0, 0
      %p13 = scmp.lt.s32.totalorder %s12, 0
      %s14 = scalar_select %p13, %s12, 0
      %s15 = smul.u32 3, %s14
      %s17 = ssub.s32 384, 384
      %18 = vsyncadd [#allocation4], %s17
      %s19 = smul.addr %s15, 128
      %s20 = scalar_lea.hbm %s0, %s19
      %s21 = sshll.u32 [#allocation3], 4
      %s22 = int_to_ptr.vmem [resolvable:$true] %s21
      %27 = dma.hbm_to_vmem [thread:$0]  %s20, 384, %s22, [#allocation4], 128, 128, 8
    $region5: #{tpu_custom_call.1} parent=1 // pred_fallthru
      _
    // Predicated region
    $region6: #{tpu_custom_call.1} parent=1 // pred_check
      _
    $region7: #{tpu_custom_call.1} parent=1 // pred_check_branch
      %29 = sbr.rel (0) target = $region9
    $region8: #{tpu_custom_call.1} parent=1 // pred_region
      %s31 = ssub.s32 384, 384
      %32 = vsyncadd [#allocation7], %s31
      %s33 = sshll.u32 [#allocation6], 4
      %s34 = int_to_ptr.vmem [resolvable:$true] %s33
      %39 = dma.hbm_to_vmem [thread:$0]  %s1, 384, %s34, [#allocation7], 128, 128, 8
    $region9: #{tpu_custom_call.1} parent=1 // pred_fallthru
      _
    // Predicated region
    $region10: #{tpu_custom_call.1} parent=1 // pred_check
      _
    $region11: #{tpu_custom_call.1} parent=1 // pred_check_branch
      %41 = sbr.rel (0) target = $region13
    $region12: #{tpu_custom_call.1} parent=1 // pred_region
      %42 = dma.done [#allocation4], 384
    $region13: #{tpu_custom_call.1} parent=1 // pred_fallthru
      _
    // Predicated region
    $region14: #{tpu_custom_call.1} parent=1 // pred_check
      _
    $region15: #{tpu_custom_call.1} parent=1 // pred_check_branch
      %44 = sbr.rel (0) target = $region17
    $region16: #{tpu_custom_call.1} parent=1 // pred_region
      %45 = dma.done [#allocation7], 384
    $region17: #{tpu_custom_call.1} parent=1 // pred_fallthru
      _
    %s46 = sadd.s32 0, 0
    %p47 = scmp.lt.s32.totalorder %s46, 0
    %s48 = scalar_select %p47, %s46, 0
    %s49 = smul.u32 3, %s48
    %p50 = scmp.eq.s32.totalorder 0, 0
    // Predicated region
    $region18: #{tpu_custom_call.1} parent=1 // pred_check
      %p51 = pneg %p50
    $region19: #{tpu_custom_call.1} parent=1 // pred_check_branch
      %53 = sbr.rel (%p51) target = $region21
    $region20: #{tpu_custom_call.1} parent=1 // pred_region
      %vm54 = vcmask 7168
      %55 = vst.msk [vmem:[#allocation2] sm:$0xff] %vm54, 0.0
      %56 = vst.msk [vmem:[#allocation2 + $0x8] sm:$0xff] %vm54, 0.0
      %57 = vst.msk [vmem:[#allocation2 + $0x10] sm:$0xff] %vm54, 0.0
    $region21: #{tpu_custom_call.1} parent=1 // pred_fallthru
      _
    %v58 = vld [vmem:[#allocation3] sm:$0xff]
    %v59 = vld [vmem:[#allocation3 + $0x8] sm:$0xff]
    %v60 = vld [vmem:[#allocation3 + $0x10] sm:$0xff]
    %v61 = vlaneseq
    %v62 = vand.u32 %v61, 127
    %63 = vmax.xlane.f32.xlu0 %v58
    %v64 = vpop.xlane.xlu0 %63
    %65 = vmax.xlane.f32.xlu0 %v59
    %v66 = vpop.xlane.xlu0 %65
    %67 = vmax.xlane.f32.xlu0 %v60
    %v68 = vpop.xlane.xlu0 %67
    %vm69 = vcmp.eq.f32.partialorder %v58, %v64
    %vm70 = vcmp.eq.f32.partialorder %v59, %v66
    %vm71 = vcmp.eq.f32.partialorder %v60, %v68
    %v72 = vsel %vm69, %v62, 128
    %v73 = vsel %vm70, %v62, 128
    %v74 = vsel %vm71, %v62, 128
    %v75 = vand.u32 %v72, 65535
    %v76 = vshra.s32 %v72, 16
    %v77 = vcvt.s32.f32 %v75
    %v78 = vcvt.s32.f32 %v76
    %79 = vmin.xlane.f32.xlu0 %v78
    %v80 = vpop.xlane.xlu0 %79
    %vm81 = vcmp.eq.f32.partialorder %v78, %v80
    %v82 = vsel %vm81, %v77, inf
    %83 = vmin.xlane.f32.xlu0 %v82
    %v84 = vpop.xlane.xlu0 %83
    %v85 = vcvt.f32.s32 %v84
    %v86 = vcvt.f32.s32 %v80
    %v87 = vshll.u32 %v86, 16
    %v88 = vadd.s32 %v87, %v85
    %v89 = vand.u32 %v73, 65535
    %v90 = vshra.s32 %v73, 16
    %v91 = vcvt.s32.f32 %v89
    %v92 = vcvt.s32.f32 %v90
    %93 = vmin.xlane.f32.xlu0 %v92
    %v94 = vpop.xlane.xlu0 %93
    %vm95 = vcmp.eq.f32.partialorder %v92, %v94
    %v96 = vsel %vm95, %v91, inf
    %97 = vmin.xlane.f32.xlu0 %v96
    %v98 = vpop.xlane.xlu0 %97
    %v99 = vcvt.f32.s32 %v98
    %v100 = vcvt.f32.s32 %v94
    %v101 = vshll.u32 %v100, 16
    %v102 = vadd.s32 %v101, %v99
    %v103 = vand.u32 %v74, 65535
    %v104 = vshra.s32 %v74, 16
    %v105 = vcvt.s32.f32 %v103
    %v106 = vcvt.s32.f32 %v104
    %107 = vmin.xlane.f32.xlu0 %v106
    %v108 = vpop.xlane.xlu0 %107
    %vm109 = vcmp.eq.f32.partialorder %v106, %v108
    %v110 = vsel %vm109, %v105, inf
    %111 = vmin.xlane.f32.xlu0 %v110
    %v112 = vpop.xlane.xlu0 %111
    %v113 = vcvt.f32.s32 %v112
    %v114 = vcvt.f32.s32 %v108
    %v115 = vshll.u32 %v114, 16
    %v116 = vadd.s32 %v115, %v113
    %vm117 = vcmp.eq.s32.totalorder %v62, %v88
    %vm118 = vcmp.eq.s32.totalorder %v62, %v102
    %vm119 = vcmp.eq.s32.totalorder %v62, %v116
    %v120 = vsel %vm117, -inf, %v58
    %v121 = vsel %vm118, -inf, %v59
    %v122 = vsel %vm119, -inf, %v60
    %123 = vmax.xlane.f32.xlu0 %v120
    %v124 = vpop.xlane.xlu0 %123
    %125 = vmax.xlane.f32.xlu0 %v121
    %v126 = vpop.xlane.xlu0 %125
    %127 = vmax.xlane.f32.xlu0 %v122
    %v128 = vpop.xlane.xlu0 %127
    %v129 = vsub.f32 %v64, %v124
    %v130 = vsub.f32 %v66, %v126
    %v131 = vsub.f32 %v68, %v128
    %v132 = vrcp.pop %v129
    %v133 = vrcp.pop %v130
    %v134 = vrcp.pop %v131
    %v135 = vsub.f32 %v58, %v64
    %v136 = vsub.f32 %v59, %v66
    %v137 = vsub.f32 %v60, %v68
    %v138 = vmul.f32 %v135, %v132
    %v139 = vmul.f32 %v136, %v133
    %v140 = vmul.f32 %v137, %v134
    %v141 = vmul.f32 %v138, 1.442695
    %v142 = vpow.pop %v141
    %v143 = vmul.f32 %v139, 1.442695
    %v144 = vpow.pop %v143
    %v145 = vmul.f32 %v140, 1.442695
    %v146 = vpow.pop %v145
    %147 = vadd.xlane.f32.xlu0 %v142
    %v148 = vpop.xlane.xlu0 %147
    %149 = vadd.xlane.f32.xlu0 %v144
    %v150 = vpop.xlane.xlu0 %149
    %151 = vadd.xlane.f32.xlu0 %v146
    %v152 = vpop.xlane.xlu0 %151
    %v153 = vlog2.pop %v148
    %v154 = vmul.f32 %v153, 0.6931472
    %v155 = vlog2.pop %v150
    %v156 = vmul.f32 %v155, 0.6931472
    %v157 = vlog2.pop %v152
    %v158 = vmul.f32 %v157, 0.6931472
    %s159 = sadd.s32 0, 0
    %p160 = scmp.lt.s32.totalorder %s159, 0
    %s161 = scalar_select %p160, %s159, 0
    %s162 = smul.u32 %s161, 24
    %s163 = scalar_lea.vmem [#allocation6], %s162
    %v164 = vld [vmem:[%s163] sm:$0xff]
    %v165 = vld [vmem:[%s163 + $0x8] sm:$0xff]
    %v166 = vld [vmem:[%s163 + $0x10] sm:$0xff]
    %167 = vset.pattern.permute.xlu0 0
    %168 = vperm.xlu0 %167, %v164
    %v169 = vpop.permute.xlu0 %168
    %170 = vset.pattern.permute.xlu0 0
    %171 = vperm.xlu0 %170, %v165
    %v172 = vpop.permute.xlu0 %171
    %173 = vset.pattern.permute.xlu0 0
    %174 = vperm.xlu0 %173, %v166
    %v175 = vpop.permute.xlu0 %174
    %vm176 = vcmp.eq.s32.totalorder %v62, %v169
    %vm177 = vcmp.eq.s32.totalorder %v62, %v172
    %vm178 = vcmp.eq.s32.totalorder %v62, %v175
    %v179 = vsel %vm176, %v138, 0.0
    %v180 = vsel %vm177, %v139, 0.0
    %v181 = vsel %vm178, %v140, 0.0
    %182 = vadd.xlane.f32.xlu0 %v179
    %v183 = vpop.xlane.xlu0 %182
    %184 = vadd.xlane.f32.xlu0 %v180
    %v185 = vpop.xlane.xlu0 %184
    %186 = vadd.xlane.f32.xlu0 %v181
    %v187 = vpop.xlane.xlu0 %186
    %v188 = vlaneseq
    %v189 = vshrl.u32 %v188, 7
    %v190 = vadd.s32 %v189, 8
    %v191 = vadd.s32 %v189, 16
    %s192 = smul.u32 %s159, 24
    %v193 = vstv %s192
    %v194 = vadd.s32 %v189, %v193
    %v195 = vadd.s32 %v190, %v193
    %v196 = vadd.s32 %v191, %v193
    %v197 = vld [vmem:[#allocation2] sm:$0xff]
    %v198 = vld [vmem:[#allocation2 + $0x8] sm:$0xff]
    %v199 = vld [vmem:[#allocation2 + $0x10] sm:$0xff]
    %vm200 = vcmp.lt.s32.totalorder %v194, 24
    %vm201 = vcmp.lt.s32.totalorder %v195, 24
    %vm202 = vcmp.lt.s32.totalorder %v196, 24
    %v203 = vsub.f32 %v183, %v154
    %v204 = vsub.f32 %v185, %v156
    %v205 = vsub.f32 %v187, %v158
    %v206 = vsel %vm200, %v203, 0.0
    %v207 = vsel %vm201, %v204, 0.0
    %v208 = vsel %vm202, %v205, 0.0
    %v209 = vadd.f32 %v197, %v206
    %v210 = vadd.f32 %v198, %v207
    %v211 = vadd.f32 %v199, %v208
    %vm212 = vcmask 7168
    %213 = vst.msk [vmem:[#allocation2] sm:$0xff] %vm212, %v209
    %214 = vst.msk [vmem:[#allocation2 + $0x8] sm:$0xff] %vm212, %v210
    %215 = vst.msk [vmem:[#allocation2 + $0x10] sm:$0xff] %vm212, %v211
    // Predicated region
    $region22: #{tpu_custom_call.1} parent=1 // pred_check
      %p216 = pneg %p50
    $region23: #{tpu_custom_call.1} parent=1 // pred_check_branch
      %218 = sbr.rel (%p216) target = $region25
    $region24: #{tpu_custom_call.1} parent=1 // pred_region
      %v219 = vld [vmem:[#allocation2] sm:$0xff]
      %v220 = vld [vmem:[#allocation2 + $0x8] sm:$0xff]
      %v221 = vld [vmem:[#allocation2 + $0x10] sm:$0xff]
      %v222 = vsel %vm212, %v219, 0.0
      %v223 = vsel %vm212, %v220, 0.0
      %v224 = vadd.f32 %v222, %v223
      %v225 = vsel %vm212, %v221, 0.0
      %v226 = vadd.f32 %v224, %v225
      %227 = vadd.xlane.f32.xlu0 %v226
      %v228 = vpop.xlane.xlu0 %227
      %v229 = vrot.slane %v228, 4
      %v230 = vadd.f32 %v228, %v229
      %v231 = vrot.slane %v230, 2
      %v232 = vadd.f32 %v230, %v231
      %v233 = vrot.slane %v232, 1
      %v234 = vadd.f32 %v232, %v233
      %s235 = vtos %v234
      %v236 = vstv %s235
      %237 = vst [vmem:[#allocation8] sm:$0xff] %v236
    $region25: #{tpu_custom_call.1} parent=1 // pred_fallthru
      _
    // Predicated region
    $region26: #{tpu_custom_call.1} parent=1 // pred_check
      _
    $region27: #{tpu_custom_call.1} parent=1 // pred_check_branch
      %239 = sbr.rel (0) target = $region29
    $region28: #{tpu_custom_call.1} parent=1 // pred_region
      %s241 = ssub.s32 128, 128
      %242 = vsyncadd [#allocation5], %s241
      %s244 = sshll.u32 [#allocation8], 4
      %s245 = int_to_ptr.vmem [resolvable:$true] %s244
      %247 = dma.vmem_to_hbm [thread:$0]  %s245, 128, %s2, [#allocation5]
    $region29: #{tpu_custom_call.1} parent=1 // pred_fallthru
      _
    // Predicated region
    $region30: #{tpu_custom_call.1} parent=1 // pred_check
      _
    $region31: #{tpu_custom_call.1} parent=1 // pred_check_branch
      %249 = sbr.rel (0) target = $region33
    $region32: #{tpu_custom_call.1} parent=1 // pred_region
      %250 = dma.done [#allocation5], 128
    $region33: #{tpu_custom_call.1} parent=1 // pred_fallthru
      _
    %251 = vsyncpa [#allocation4], 1
    %252 = vsyncpa [#allocation7], 1
    %253 = vsyncpa [#allocation5], 1

</llo_original>
